<compile_context>
chip_gen: v7x
topology: tpu7x:2x2x1
jax: 0.10.0
libtpu: 0.0.40
codegen_flags: <defaults>
</compile_context>

<pallas_src>
import jax
import jax.numpy as jnp
from jax import lax
from jax.experimental import pallas as pl
from jax.experimental.pallas import tpu as pltpu

D = 768
EPS = 1e-8          # torch.nn.functional.cosine_similarity default eps
_CHUNK = 128        # lane-sized chunks for the |x|^2 reduction
_LANES = 128


def _row_logits(x_ref, w_ref, wsq_ref):
    """sigmoid(cos(x_row, w)) for every row of the tile -> (TB, 1) float32."""
    x = x_ref[...]                                    # (TB, D), native dtype
    # MXU: <x_row, w> with f32 accumulation (bf16 inputs stay bf16 here).
    dot = jnp.dot(x, w_ref[...], preferred_element_type=jnp.float32)   # (TB, 1)

    # |x|^2 accumulated over 128-lane chunks: bounds the f32 upcast temporary
    # to (TB, 128) regardless of tile size / input dtype.
    tb = x.shape[0]
    x_sq = jnp.zeros((tb, 1), jnp.float32)
    for c in range(0, D, _CHUNK):
        xc = x[:, c:c + _CHUNK].astype(jnp.float32)
        x_sq = x_sq + jnp.sum(xc * xc, axis=1, keepdims=True)

    w_sq = wsq_ref[0, 0]                              # f32 scalar from SMEM
    # torch: cos = <x,w> / sqrt(max(|x|^2 * |w|^2, eps^2))
    cos = dot * lax.rsqrt(jnp.maximum(x_sq * w_sq, EPS * EPS))
    return jax.nn.sigmoid(cos)                        # (TB, 1) f32 (EUP exp)


def _kernel_lane_major(x_ref, w_ref, wsq_ref, o_ref):
    # o_ref: (2, TB) -- batch on the lane axis (lane-dense writeback).
    logit = _row_logits(x_ref, w_ref, wsq_ref)        # (TB, 1)
    tb = logit.shape[0]
    # Sublane -> lane relayout: broadcast the column across 128 lanes, then do a
    # tile-aligned (TB, 128) -> (128, TB) transpose on the XLU and take one row.
    # TB is a multiple of 128, so no padded-transpose path is hit.
    lt = jnp.transpose(jnp.broadcast_to(logit, (tb, _LANES)), (1, 0))  # (128, TB)
    row = lt[0:1, :]                                  # (1, TB)
    o_ref[...] = jnp.concatenate([1.0 - row, row], axis=0).astype(o_ref.dtype)


def _kernel_row_major(x_ref, w_ref, wsq_ref, o_ref):
    # o_ref: (TB, 2) -- small-batch fallback; lane padding is irrelevant here.
    logit = _row_logits(x_ref, w_ref, wsq_ref)        # (TB, 1)
    o_ref[:, 0:1] = (1.0 - logit).astype(o_ref.dtype)
    o_ref[:, 1:2] = logit.astype(o_ref.dtype)


def cosine_classifier(x: jax.Array, weight: jax.Array,
                      *, block_rows: int = 2048) -> jax.Array:
    """x: (B, 768) f32/bf16, weight: (768,) -> (B, 2) float32."""
    B, Dx = x.shape
    assert Dx == D, f"expected feature dim {D}, got {Dx}"

    w_col = weight.astype(x.dtype).reshape(D, 1)       # MXU rhs, in x's dtype
    wf = weight.astype(jnp.float32)
    w_sq = jnp.sum(wf * wf).reshape(1, 1)              # hoisted ||w||^2 scalar

    lane_major = B >= _LANES
    if lane_major:
        # Lane-dense path: TB must be a multiple of 128 so the in-kernel relayout
        # transpose stays tile-aligned (a partial *last* tile is still fine).
        TB = max(_LANES, (min(block_rows, B) // _LANES) * _LANES)
        kernel = _kernel_lane_major
        out_shape = jax.ShapeDtypeStruct((2, B), jnp.float32)
        out_spec = pl.BlockSpec((2, TB), lambda i: (0, i))
    else:
        TB = B
        kernel = _kernel_row_major
        out_shape = jax.ShapeDtypeStruct((B, 2), jnp.float32)
        out_spec = pl.BlockSpec((TB, 2), lambda i: (i, 0))

    grid = (pl.cdiv(B, TB),)

    out = pl.pallas_call(
        kernel,
        out_shape=out_shape,
        grid_spec=pltpu.PrefetchScalarGridSpec(
            num_scalar_prefetch=0,
            grid=grid,
            in_specs=[
                pl.BlockSpec((TB, D), lambda i: (i, 0)),             # x tile
                pl.BlockSpec((D, 1), lambda i: (0, 0)),              # weight column
                pl.BlockSpec(memory_space=pltpu.MemorySpace.SMEM),   # ||w||^2
            ],
            out_specs=out_spec,
        ),
        compiler_params=pltpu.CompilerParams(
            dimension_semantics=("parallel",),       # v7x megacore; free elsewhere
            vmem_limit_bytes=48 * 1024 * 1024,       # 2048-row tiles double-buffered
        ),
    )(x, w_col, w_sq)

    return jnp.transpose(out) if lane_major else out


def _reference(x, weight):
    xf = x.astype(jnp.float32)
    wf = weight.astype(jnp.float32)
    dot = jnp.sum(xf * wf[None, :], axis=1)
    x_sq = jnp.sum(xf * xf, axis=1)
    w_sq = jnp.sum(wf * wf)
    cos = dot / jnp.sqrt(jnp.maximum(x_sq * w_sq, EPS * EPS))
    logit = jax.nn.sigmoid(cos)
    return jnp.stack([1.0 - logit, logit], axis=1)


if __name__ == "__main__":
    key = jax.random.PRNGKey(0)
    kw, k1, k2, k3 = jax.random.split(key, 4)

    # deterministic stand-in for nn.Parameter(torch.randn(768))
    weight = jax.random.normal(kw, (D,), dtype=jnp.float32)

    # 1) Tiny batch -> simple row-major path (module's natural usage).
    x1 = jax.random.normal(k1, (8, D), dtype=jnp.float32)
    o1 = jax.block_until_ready(cosine_classifier(x1, weight))
    assert o1.shape == (8, 2)
    assert jnp.allclose(o1, _reference(x1, weight), atol=2e-5)

    # 2) Lane-dense path, two full tiles (TB=128, grid=2).
    x2 = jax.random.normal(k2, (256, D), dtype=jnp.float32)
    o2 = jax.block_until_ready(cosine_classifier(x2, weight, block_rows=128))
    assert o2.shape == (256, 2)
    assert jnp.allclose(o2, _reference(x2, weight), atol=2e-5)

    # 3) Lane-dense path with a partial last tile (200 rows, TB=128).
    x3 = jax.random.normal(k3, (200, D), dtype=jnp.float32)
    o3 = jax.block_until_ready(cosine_classifier(x3, weight, block_rows=128))
    assert o3.shape == (200, 2)
    assert jnp.allclose(o3, _reference(x3, weight), atol=2e-5)

    print("KERNEL_OK")
</pallas_src>

<mosaic_0001>
module attributes {stable_mosaic.version = 11 : i64} {
  func.func @_kernel_row_major(%arg0: i32, %arg1: memref<8x768xf32, #tpu.memory_space<vmem>>, %arg2: memref<768x1xf32, #tpu.memory_space<vmem>>, %arg3: memref<1x1xf32, #tpu.memory_space<smem>>, %arg4: memref<8x2xf32, #tpu.memory_space<vmem>>) attributes {dimension_semantics = [#tpu.dimension_semantics<parallel>], iteration_bounds = array<i64: 1>, scalar_prefetch = 0 : i64, scratch_operands = 0 : i64, tpu.core_type = #tpu.core_type<tc>, window_params = [{transform_indices = @transform_0, window_bounds = array<i64: 8, 768>}, {pipeline_mode = #tpu.pipeline_mode<synchronous>, transform_indices = @transform_1, window_bounds = array<i64: 768, 1>}, {transform_indices = @transform_2, window_bounds = array<i64: 1, 1>}, {transform_indices = @transform_3, window_bounds = array<i64: 8, 2>}]} {
    %c0 = arith.constant 0 : index
    %c0_0 = arith.constant 0 : index
    %0 = vector.load %arg1[%c0, %c0_0] : memref<8x768xf32, #tpu.memory_space<vmem>>, vector<8x768xf32>
    %c0_1 = arith.constant 0 : index
    %c0_2 = arith.constant 0 : index
    %1 = vector.load %arg2[%c0_1, %c0_2] : memref<768x1xf32, #tpu.memory_space<vmem>>, vector<768x1xf32>
    %cst = arith.constant dense<0.000000e+00> : vector<8x1xf32>
    %2 = tpu.matmul %0, %1, %cst {dimension_numbers = #tpu.dot_dimension_numbers<[1], [0], [0], [1], [0, 0, 1, 1], [], []>} : vector<8x768xf32>, vector<768x1xf32>, vector<8x1xf32> -> vector<8x1xf32>
    %cst_3 = arith.constant 0.000000e+00 : f32
    %3 = vector.broadcast %cst_3 : f32 to vector<8x1xf32>
    %4 = vector.extract_strided_slice %0 {offsets = [0, 0], sizes = [8, 128], strides = [1, 1]} : vector<8x768xf32> to vector<8x128xf32>
    %5 = arith.mulf %4, %4 : vector<8x128xf32>
    %cst_4 = arith.constant dense<0.000000e+00> : vector<8xf32>
    %6 = vector.multi_reduction <add>, %5, %cst_4 [1] : vector<8x128xf32> to vector<8xf32>
    %7 = vector.shape_cast %6 : vector<8xf32> to vector<8x1xf32>
    %8 = arith.addf %3, %7 : vector<8x1xf32>
    %9 = vector.extract_strided_slice %0 {offsets = [0, 128], sizes = [8, 128], strides = [1, 1]} : vector<8x768xf32> to vector<8x128xf32>
    %10 = arith.mulf %9, %9 : vector<8x128xf32>
    %cst_5 = arith.constant dense<0.000000e+00> : vector<8xf32>
    %11 = vector.multi_reduction <add>, %10, %cst_5 [1] : vector<8x128xf32> to vector<8xf32>
    %12 = vector.shape_cast %11 : vector<8xf32> to vector<8x1xf32>
    %13 = arith.addf %8, %12 : vector<8x1xf32>
    %14 = vector.extract_strided_slice %0 {offsets = [0, 256], sizes = [8, 128], strides = [1, 1]} : vector<8x768xf32> to vector<8x128xf32>
    %15 = arith.mulf %14, %14 : vector<8x128xf32>
    %cst_6 = arith.constant dense<0.000000e+00> : vector<8xf32>
    %16 = vector.multi_reduction <add>, %15, %cst_6 [1] : vector<8x128xf32> to vector<8xf32>
    %17 = vector.shape_cast %16 : vector<8xf32> to vector<8x1xf32>
    %18 = arith.addf %13, %17 : vector<8x1xf32>
    %19 = vector.extract_strided_slice %0 {offsets = [0, 384], sizes = [8, 128], strides = [1, 1]} : vector<8x768xf32> to vector<8x128xf32>
    %20 = arith.mulf %19, %19 : vector<8x128xf32>
    %cst_7 = arith.constant dense<0.000000e+00> : vector<8xf32>
    %21 = vector.multi_reduction <add>, %20, %cst_7 [1] : vector<8x128xf32> to vector<8xf32>
    %22 = vector.shape_cast %21 : vector<8xf32> to vector<8x1xf32>
    %23 = arith.addf %18, %22 : vector<8x1xf32>
    %24 = vector.extract_strided_slice %0 {offsets = [0, 512], sizes = [8, 128], strides = [1, 1]} : vector<8x768xf32> to vector<8x128xf32>
    %25 = arith.mulf %24, %24 : vector<8x128xf32>
    %cst_8 = arith.constant dense<0.000000e+00> : vector<8xf32>
    %26 = vector.multi_reduction <add>, %25, %cst_8 [1] : vector<8x128xf32> to vector<8xf32>
    %27 = vector.shape_cast %26 : vector<8xf32> to vector<8x1xf32>
    %28 = arith.addf %23, %27 : vector<8x1xf32>
    %29 = vector.extract_strided_slice %0 {offsets = [0, 640], sizes = [8, 128], strides = [1, 1]} : vector<8x768xf32> to vector<8x128xf32>
    %30 = arith.mulf %29, %29 : vector<8x128xf32>
    %cst_9 = arith.constant dense<0.000000e+00> : vector<8xf32>
    %31 = vector.multi_reduction <add>, %30, %cst_9 [1] : vector<8x128xf32> to vector<8xf32>
    %32 = vector.shape_cast %31 : vector<8xf32> to vector<8x1xf32>
    %33 = arith.addf %28, %32 : vector<8x1xf32>
    %c0_10 = arith.constant 0 : index
    %c0_11 = arith.constant 0 : index
    %34 = memref.load %arg3[%c0_10, %c0_11] : memref<1x1xf32, #tpu.memory_space<smem>>
    %35 = vector.broadcast %34 : f32 to vector<8x1xf32>
    %36 = arith.mulf %33, %35 : vector<8x1xf32>
    %cst_12 = arith.constant 1.000000e-16 : f32
    %37 = vector.broadcast %cst_12 : f32 to vector<8x1xf32>
    %38 = arith.maximumf %36, %37 : vector<8x1xf32>
    %39 = math.rsqrt %38 : vector<8x1xf32>
    %40 = arith.mulf %2, %39 : vector<8x1xf32>
    %41 = arith.negf %40 : vector<8x1xf32>
    %42 = math.exp %41 : vector<8x1xf32>
    %cst_13 = arith.constant 1.000000e+00 : f32
    %43 = vector.broadcast %cst_13 : f32 to vector<8x1xf32>
    %44 = arith.addf %43, %42 : vector<8x1xf32>
    %45 = arith.divf %43, %44 : vector<8x1xf32>
    %cst_14 = arith.constant 1.000000e+00 : f32
    %46 = vector.broadcast %cst_14 : f32 to vector<8x1xf32>
    %47 = arith.subf %46, %45 : vector<8x1xf32>
    %c0_15 = arith.constant 0 : index
    %c0_16 = arith.constant 0 : index
    %48 = vector.load %arg4[%c0_15, %c0_16] : memref<8x2xf32, #tpu.memory_space<vmem>>, vector<8x1xf32>
    tpu.vector_store %arg4[%c0_15, %c0_16], %47 {strides = array<i32>} : memref<8x2xf32, #tpu.memory_space<vmem>>, vector<8x1xf32>,
    %c0_17 = arith.constant 0 : index
    %c1 = arith.constant 1 : index
    %49 = vector.load %arg4[%c0_17, %c1] : memref<8x2xf32, #tpu.memory_space<vmem>>, vector<8x1xf32>
    tpu.vector_store %arg4[%c0_17, %c1], %45 {strides = array<i32>} : memref<8x2xf32, #tpu.memory_space<vmem>>, vector<8x1xf32>,
    return
  }
  func.func @transform_0(%arg0: i32) -> (i32, i32) {
    %c0_i32 = arith.constant 0 : i32
    %c0_i32_0 = arith.constant 0 : i32
    return %arg0, %c0_i32 : i32, i32
  }
  func.func @transform_1(%arg0: i32) -> (i32, i32) {
    %c0_i32 = arith.constant 0 : i32
    %c0_i32_0 = arith.constant 0 : i32
    %c0_i32_1 = arith.constant 0 : i32
    return %c0_i32, %c0_i32_0 : i32, i32
  }
  func.func @transform_2(%arg0: i32) -> (i32, i32) {
    %c0_i32 = arith.constant 0 : i32
    %c0_i32_0 = arith.constant 0 : i32
    %c0_i32_1 = arith.constant 0 : i32
    return %c0_i32, %c0_i32_0 : i32, i32
  }
  func.func @transform_3(%arg0: i32) -> (i32, i32) {
    %c0_i32 = arith.constant 0 : i32
    %c0_i32_0 = arith.constant 0 : i32
    return %arg0, %c0_i32 : i32, i32
  }
}

</mosaic_0001>

<llo_original>
// kernel: tpu_custom_call.1
$region0: #{tpu_custom_call.1}
  #allocation0 [shape = 'u32[]', space=smem, size = 0x4, offset = 0x4, fixed_abs, tag = 'smem constant byte address 0x4 - core index']
  #allocation1 [shape = 'u32[144,128]{1,0:T(1,128)}', space=vmem, size = 0x12000, scoped, tag = 'internal scratch']
  #allocation2 [shape = 'f32[1,1]{1,0:T(1,128)S(6)}', space=smem, size = 0x200, scoped, tag = 'scoped memory for tpu_custom_call.1']
  %s0 = inlined_call_operand.vmem [shape: f32[8,768], index: 0, kind: input, shape index: {}]
  %s1 = inlined_call_operand.vmem [shape: f32[768,1], index: 1, kind: input, shape index: {}]
  %s2 = inlined_call_operand.<no memory space> [shape: f32[1,1], index: 2, kind: input, shape index: {}]
  %s3 = inlined_call_operand.vmem [shape: f32[8,2], index: 3, kind: output, shape index: {}]
  %s4 = sld [smem:[#allocation0]]
  $region22: #{tpu_custom_call.1} parent=0
    _
  %s6 = ssub.s32 1, %s4
  %s7 = scalar_select 0, %s6, %s4
  %8 = sst [smem:[#allocation2]] %s2
  // Predicated region
  $region2: #{tpu_custom_call.1} parent=0 // pred_check
    _
  $region3: #{tpu_custom_call.1} parent=0 // pred_check_branch
    %10 = sbr.rel (0) target = $region5
  $region4: #{tpu_custom_call.1} parent=0 // pred_region
    _
  $region5: #{tpu_custom_call.1} parent=0 // pred_fallthru
    _
  // Predicated region
  $region6: #{tpu_custom_call.1} parent=0 // pred_check
    _
  $region7: #{tpu_custom_call.1} parent=0 // pred_check_branch
    %12 = sbr.rel (0) target = $region9
  $region8: #{tpu_custom_call.1} parent=0 // pred_region
    _
  $region9: #{tpu_custom_call.1} parent=0 // pred_fallthru
    _
  // Predicated region
  $region10: #{tpu_custom_call.1} parent=0 // pred_check
    _
  $region11: #{tpu_custom_call.1} parent=0 // pred_check_branch
    %14 = sbr.rel (0) target = $region13
  $region12: #{tpu_custom_call.1} parent=0 // pred_region
    _
  $region13: #{tpu_custom_call.1} parent=0 // pred_fallthru
    _
  %v15 = vld [vmem:[%s0] sm:$0xff]
  %v16 = vld [vmem:[%s0 + $0x8] sm:$0xff]
  %v17 = vld [vmem:[%s0 + $0x10] sm:$0xff]
  %v18 = vld [vmem:[%s0 + $0x18] sm:$0xff]
  %v19 = vld [vmem:[%s0 + $0x20] sm:$0xff]
  %v20 = vld [vmem:[%s0 + $0x28] sm:$0xff]
  %v21 = vld [vmem:[%s1] sm:$0xff]
  %v22 = vld [vmem:[%s1 + $0x8] sm:$0xff]
  %v23 = vld [vmem:[%s1 + $0x10] sm:$0xff]
  %v24 = vld [vmem:[%s1 + $0x18] sm:$0xff]
  %v25 = vld [vmem:[%s1 + $0x20] sm:$0xff]
  %v26 = vld [vmem:[%s1 + $0x28] sm:$0xff]
  %v27 = vld [vmem:[%s1 + $0x30] sm:$0xff]
  %v28 = vld [vmem:[%s1 + $0x38] sm:$0xff]
  %v29 = vld [vmem:[%s1 + $0x40] sm:$0xff]
  %v30 = vld [vmem:[%s1 + $0x48] sm:$0xff]
  %v31 = vld [vmem:[%s1 + $0x50] sm:$0xff]
  %v32 = vld [vmem:[%s1 + $0x58] sm:$0xff]
  %v33 = vld [vmem:[%s1 + $0x60] sm:$0xff]
  %v34 = vld [vmem:[%s1 + $0x68] sm:$0xff]
  %v35 = vld [vmem:[%s1 + $0x70] sm:$0xff]
  %v36 = vld [vmem:[%s1 + $0x78] sm:$0xff]
  %v37 = vld [vmem:[%s1 + $0x80] sm:$0xff]
  %v38 = vld [vmem:[%s1 + $0x88] sm:$0xff]
  %v39 = vld [vmem:[%s1 + $0x90] sm:$0xff]
  %v40 = vld [vmem:[%s1 + $0x98] sm:$0xff]
  %v41 = vld [vmem:[%s1 + $0xa0] sm:$0xff]
  %v42 = vld [vmem:[%s1 + $0xa8] sm:$0xff]
  %v43 = vld [vmem:[%s1 + $0xb0] sm:$0xff]
  %v44 = vld [vmem:[%s1 + $0xb8] sm:$0xff]
  %v45 = vld [vmem:[%s1 + $0xc0] sm:$0xff]
  %v46 = vld [vmem:[%s1 + $0xc8] sm:$0xff]
  %v47 = vld [vmem:[%s1 + $0xd0] sm:$0xff]
  %v48 = vld [vmem:[%s1 + $0xd8] sm:$0xff]
  %v49 = vld [vmem:[%s1 + $0xe0] sm:$0xff]
  %v50 = vld [vmem:[%s1 + $0xe8] sm:$0xff]
  %v51 = vld [vmem:[%s1 + $0xf0] sm:$0xff]
  %v52 = vld [vmem:[%s1 + $0xf8] sm:$0xff]
  %v53 = vld [vmem:[%s1 + $0x100] sm:$0xff]
  %v54 = vld [vmem:[%s1 + $0x108] sm:$0xff]
  %v55 = vld [vmem:[%s1 + $0x110] sm:$0xff]
  %v56 = vld [vmem:[%s1 + $0x118] sm:$0xff]
  %v57 = vld [vmem:[%s1 + $0x120] sm:$0xff]
  %v58 = vld [vmem:[%s1 + $0x128] sm:$0xff]
  %v59 = vld [vmem:[%s1 + $0x130] sm:$0xff]
  %v60 = vld [vmem:[%s1 + $0x138] sm:$0xff]
  %v61 = vld [vmem:[%s1 + $0x140] sm:$0xff]
  %v62 = vld [vmem:[%s1 + $0x148] sm:$0xff]
  %v63 = vld [vmem:[%s1 + $0x150] sm:$0xff]
  %v64 = vld [vmem:[%s1 + $0x158] sm:$0xff]
  %v65 = vld [vmem:[%s1 + $0x160] sm:$0xff]
  %v66 = vld [vmem:[%s1 + $0x168] sm:$0xff]
  %v67 = vld [vmem:[%s1 + $0x170] sm:$0xff]
  %v68 = vld [vmem:[%s1 + $0x178] sm:$0xff]
  %v69 = vld [vmem:[%s1 + $0x180] sm:$0xff]
  %v70 = vld [vmem:[%s1 + $0x188] sm:$0xff]
  %v71 = vld [vmem:[%s1 + $0x190] sm:$0xff]
  %v72 = vld [vmem:[%s1 + $0x198] sm:$0xff]
  %v73 = vld [vmem:[%s1 + $0x1a0] sm:$0xff]
  %v74 = vld [vmem:[%s1 + $0x1a8] sm:$0xff]
  %v75 = vld [vmem:[%s1 + $0x1b0] sm:$0xff]
  %v76 = vld [vmem:[%s1 + $0x1b8] sm:$0xff]
  %v77 = vld [vmem:[%s1 + $0x1c0] sm:$0xff]
  %v78 = vld [vmem:[%s1 + $0x1c8] sm:$0xff]
  %v79 = vld [vmem:[%s1 + $0x1d0] sm:$0xff]
  %v80 = vld [vmem:[%s1 + $0x1d8] sm:$0xff]
  %v81 = vld [vmem:[%s1 + $0x1e0] sm:$0xff]
  %v82 = vld [vmem:[%s1 + $0x1e8] sm:$0xff]
  %v83 = vld [vmem:[%s1 + $0x1f0] sm:$0xff]
  %v84 = vld [vmem:[%s1 + $0x1f8] sm:$0xff]
  %v85 = vld [vmem:[%s1 + $0x200] sm:$0xff]
  %v86 = vld [vmem:[%s1 + $0x208] sm:$0xff]
  %v87 = vld [vmem:[%s1 + $0x210] sm:$0xff]
  %v88 = vld [vmem:[%s1 + $0x218] sm:$0xff]
  %v89 = vld [vmem:[%s1 + $0x220] sm:$0xff]
  %v90 = vld [vmem:[%s1 + $0x228] sm:$0xff]
  %v91 = vld [vmem:[%s1 + $0x230] sm:$0xff]
  %v92 = vld [vmem:[%s1 + $0x238] sm:$0xff]
  %v93 = vld [vmem:[%s1 + $0x240] sm:$0xff]
  %v94 = vld [vmem:[%s1 + $0x248] sm:$0xff]
  %v95 = vld [vmem:[%s1 + $0x250] sm:$0xff]
  %v96 = vld [vmem:[%s1 + $0x258] sm:$0xff]
  %v97 = vld [vmem:[%s1 + $0x260] sm:$0xff]
  %v98 = vld [vmem:[%s1 + $0x268] sm:$0xff]
  %v99 = vld [vmem:[%s1 + $0x270] sm:$0xff]
  %v100 = vld [vmem:[%s1 + $0x278] sm:$0xff]
  %v101 = vld [vmem:[%s1 + $0x280] sm:$0xff]
  %v102 = vld [vmem:[%s1 + $0x288] sm:$0xff]
  %v103 = vld [vmem:[%s1 + $0x290] sm:$0xff]
  %v104 = vld [vmem:[%s1 + $0x298] sm:$0xff]
  %v105 = vld [vmem:[%s1 + $0x2a0] sm:$0xff]
  %v106 = vld [vmem:[%s1 + $0x2a8] sm:$0xff]
  %v107 = vld [vmem:[%s1 + $0x2b0] sm:$0xff]
  %v108 = vld [vmem:[%s1 + $0x2b8] sm:$0xff]
  %v109 = vld [vmem:[%s1 + $0x2c0] sm:$0xff]
  %v110 = vld [vmem:[%s1 + $0x2c8] sm:$0xff]
  %v111 = vld [vmem:[%s1 + $0x2d0] sm:$0xff]
  %v112 = vld [vmem:[%s1 + $0x2d8] sm:$0xff]
  %v113 = vld [vmem:[%s1 + $0x2e0] sm:$0xff]
  %v114 = vld [vmem:[%s1 + $0x2e8] sm:$0xff]
  %v115 = vld [vmem:[%s1 + $0x2f0] sm:$0xff]
  %v116 = vld [vmem:[%s1 + $0x2f8] sm:$0xff]
  %117 = vmatprep.subr.mxu0 0.0
  %118 = vmatpush1.msra.mxu0 %v21
  %119 = vmatprep.subr.mxu0 0.0
  %120 = vmatpush1.msra.mxu0 %v22
  %121 = vmatprep.subr.mxu0 0.0
  %122 = vmatpush1.msra.mxu0 %v23
  %123 = vmatprep.subr.mxu0 0.0
  %124 = vmatpush1.msra.mxu0 %v24
  %125 = vmatprep.subr.mxu0 0.0
  %126 = vmatpush1.msra.mxu0 %v25
  %127 = vmatprep.subr.mxu0 0.0
  %128 = vmatpush1.msra.mxu0 %v26
  %129 = vmatprep.subr.mxu0 0.0
  %130 = vmatpush1.msra.mxu0 %v27
  %131 = vmatprep.subr.mxu0 0.0
  %132 = vmatpush1.msra.mxu0 %v28
  %133 = vmatprep.subr.mxu0 0.0
  %134 = vmatpush1.msra.mxu0 %v29
  %135 = vmatprep.subr.mxu0 0.0
  %136 = vmatpush1.msra.mxu0 %v30
  %137 = vmatprep.subr.mxu0 0.0
  %138 = vmatpush1.msra.mxu0 %v31
  %139 = vmatprep.subr.mxu0 0.0
  %140 = vmatpush1.msra.mxu0 %v32
  %141 = vmatprep.subr.mxu0 0.0
  %142 = vmatpush1.msra.mxu0 %v33
  %143 = vmatprep.subr.mxu0 0.0
  %144 = vmatpush1.msra.mxu0 %v34
  %145 = vmatprep.subr.mxu0 0.0
  %146 = vmatpush1.msra.mxu0 %v35
  %147 = vmatprep.subr.mxu0 0.0
  %148 = vmatpush1.msra.mxu0 %v36
  %149 = vmatprep.subr.mxu0 0.0
  %150 = vmatpush1.msra.mxu0 %v37
  %151 = vmatprep.subr.mxu0 0.0
  %152 = vmatpush1.msra.mxu0 %v38
  %153 = vmatprep.subr.mxu0 0.0
  %154 = vmatpush1.msra.mxu0 %v39
  %155 = vmatprep.subr.mxu0 0.0
  %156 = vmatpush1.msra.mxu0 %v40
  %157 = vmatprep.subr.mxu0 0.0
  %158 = vmatpush1.msra.mxu0 %v41
  %159 = vmatprep.subr.mxu0 0.0
  %160 = vmatpush1.msra.mxu0 %v42
  %161 = vmatprep.subr.mxu0 0.0
  %162 = vmatpush1.msra.mxu0 %v43
  %163 = vmatprep.subr.mxu0 0.0
  %164 = vmatpush1.msra.mxu0 %v44
  %165 = vmatprep.subr.mxu0 0.0
  %166 = vmatpush1.msra.mxu0 %v45
  %167 = vmatprep.subr.mxu0 0.0
  %168 = vmatpush1.msra.mxu0 %v46
  %169 = vmatprep.subr.mxu0 0.0
  %170 = vmatpush1.msra.mxu0 %v47
  %171 = vmatprep.subr.mxu0 0.0
  %172 = vmatpush1.msra.mxu0 %v48
  %173 = vmatprep.subr.mxu0 0.0
  %174 = vmatpush1.msra.mxu0 %v49
  %175 = vmatprep.subr.mxu0 0.0
  %176 = vmatpush1.msra.mxu0 %v50
  %177 = vmatprep.subr.mxu0 0.0
  %178 = vmatpush1.msra.mxu0 %v51
  %179 = vmatprep.subr.mxu0 0.0
  %180 = vmatpush1.msra.mxu0 %v52
  %181 = vmatprep.mubr.f32.mxu0 %v16
  %182 = vmatmul.mubr.f32.gmra.mrb[0].mxu0 %v15
  %v183 = vpop.f32.mrb[0].mxu0
  %v184 = vadd.f32 0.0, %v183
  %v185 = vpop.f32.mrb[0].mxu0
  %186 = vdwg.mxu0
  %187 = vmatprep.subr.mxu0 0.0
  %188 = vmatpush1.msra.mxu0 %v53
  %189 = vmatprep.subr.mxu0 0.0
  %190 = vmatpush1.msra.mxu0 %v54
  %191 = vmatprep.subr.mxu0 0.0
  %192 = vmatpush1.msra.mxu0 %v55
  %193 = vmatprep.subr.mxu0 0.0
  %194 = vmatpush1.msra.mxu0 %v56
  %195 = vmatprep.subr.mxu0 0.0
  %196 = vmatpush1.msra.mxu0 %v57
  %197 = vmatprep.subr.mxu0 0.0
  %198 = vmatpush1.msra.mxu0 %v58
  %199 = vmatprep.subr.mxu0 0.0
  %200 = vmatpush1.msra.mxu0 %v59
  %201 = vmatprep.subr.mxu0 0.0
  %202 = vmatpush1.msra.mxu0 %v60
  %203 = vmatprep.subr.mxu0 0.0
  %204 = vmatpush1.msra.mxu0 %v61
  %205 = vmatprep.subr.mxu0 0.0
  %206 = vmatpush1.msra.mxu0 %v62
  %207 = vmatprep.subr.mxu0 0.0
  %208 = vmatpush1.msra.mxu0 %v63
  %209 = vmatprep.subr.mxu0 0.0
  %210 = vmatpush1.msra.mxu0 %v64
  %211 = vmatprep.subr.mxu0 0.0
  %212 = vmatpush1.msra.mxu0 %v65
  %213 = vmatprep.subr.mxu0 0.0
  %214 = vmatpush1.msra.mxu0 %v66
  %215 = vmatprep.subr.mxu0 0.0
  %216 = vmatpush1.msra.mxu0 %v67
  %217 = vmatprep.subr.mxu0 0.0
  %218 = vmatpush1.msra.mxu0 %v68
  %219 = vmatprep.subr.mxu0 0.0
  %220 = vmatpush1.msra.mxu0 %v69
  %221 = vmatprep.subr.mxu0 0.0
  %222 = vmatpush1.msra.mxu0 %v70
  %223 = vmatprep.subr.mxu0 0.0
  %224 = vmatpush1.msra.mxu0 %v71
  %225 = vmatprep.subr.mxu0 0.0
  %226 = vmatpush1.msra.mxu0 %v72
  %227 = vmatprep.subr.mxu0 0.0
  %228 = vmatpush1.msra.mxu0 %v73
  %229 = vmatprep.subr.mxu0 0.0
  %230 = vmatpush1.msra.mxu0 %v74
  %231 = vmatprep.subr.mxu0 0.0
  %232 = vmatpush1.msra.mxu0 %v75
  %233 = vmatprep.subr.mxu0 0.0
  %234 = vmatpush1.msra.mxu0 %v76
  %235 = vmatprep.subr.mxu0 0.0
  %236 = vmatpush1.msra.mxu0 %v77
  %237 = vmatprep.subr.mxu0 0.0
  %238 = vmatpush1.msra.mxu0 %v78
  %239 = vmatprep.subr.mxu0 0.0
  %240 = vmatpush1.msra.mxu0 %v79
  %241 = vmatprep.subr.mxu0 0.0
  %242 = vmatpush1.msra.mxu0 %v80
  %243 = vmatprep.subr.mxu0 0.0
  %244 = vmatpush1.msra.mxu0 %v81
  %245 = vmatprep.subr.mxu0 0.0
  %246 = vmatpush1.msra.mxu0 %v82
  %247 = vmatprep.subr.mxu0 0.0
  %248 = vmatpush1.msra.mxu0 %v83
  %249 = vmatprep.subr.mxu0 0.0
  %250 = vmatpush1.msra.mxu0 %v84
  %251 = vmatprep.mubr.f32.mxu0 %v18
  %252 = vmatmul.mubr.f32.gmra.mrb[0].mxu0 %v17
  %v253 = vpop.f32.mrb[0].mxu0
  %v254 = vadd.f32 %v184, %v253
  %v255 = vpop.f32.mrb[0].mxu0
  %256 = vdwg.mxu0
  %257 = vmatprep.subr.mxu0 0.0
  %258 = vmatpush1.msra.mxu0 %v85
  %259 = vmatprep.subr.mxu0 0.0
  %260 = vmatpush1.msra.mxu0 %v86
  %261 = vmatprep.subr.mxu0 0.0
  %262 = vmatpush1.msra.mxu0 %v87
  %263 = vmatprep.subr.mxu0 0.0
  %264 = vmatpush1.msra.mxu0 %v88
  %265 = vmatprep.subr.mxu0 0.0
  %266 = vmatpush1.msra.mxu0 %v89
  %267 = vmatprep.subr.mxu0 0.0
  %268 = vmatpush1.msra.mxu0 %v90
  %269 = vmatprep.subr.mxu0 0.0
  %270 = vmatpush1.msra.mxu0 %v91
  %271 = vmatprep.subr.mxu0 0.0
  %272 = vmatpush1.msra.mxu0 %v92
  %273 = vmatprep.subr.mxu0 0.0
  %274 = vmatpush1.msra.mxu0 %v93
  %275 = vmatprep.subr.mxu0 0.0
  %276 = vmatpush1.msra.mxu0 %v94
  %277 = vmatprep.subr.mxu0 0.0
  %278 = vmatpush1.msra.mxu0 %v95
  %279 = vmatprep.subr.mxu0 0.0
  %280 = vmatpush1.msra.mxu0 %v96
  %281 = vmatprep.subr.mxu0 0.0
  %282 = vmatpush1.msra.mxu0 %v97
  %283 = vmatprep.subr.mxu0 0.0
  %284 = vmatpush1.msra.mxu0 %v98
  %285 = vmatprep.subr.mxu0 0.0
  %286 = vmatpush1.msra.mxu0 %v99
  %287 = vmatprep.subr.mxu0 0.0
  %288 = vmatpush1.msra.mxu0 %v100
  %289 = vmatprep.subr.mxu0 0.0
  %290 = vmatpush1.msra.mxu0 %v101
  %291 = vmatprep.subr.mxu0 0.0
  %292 = vmatpush1.msra.mxu0 %v102
  %293 = vmatprep.subr.mxu0 0.0
  %294 = vmatpush1.msra.mxu0 %v103
  %295 = vmatprep.subr.mxu0 0.0
  %296 = vmatpush1.msra.mxu0 %v104
  %297 = vmatprep.subr.mxu0 0.0
  %298 = vmatpush1.msra.mxu0 %v105
  %299 = vmatprep.subr.mxu0 0.0
  %300 = vmatpush1.msra.mxu0 %v106
  %301 = vmatprep.subr.mxu0 0.0
  %302 = vmatpush1.msra.mxu0 %v107
  %303 = vmatprep.subr.mxu0 0.0
  %304 = vmatpush1.msra.mxu0 %v108
  %305 = vmatprep.subr.mxu0 0.0
  %306 = vmatpush1.msra.mxu0 %v109
  %307 = vmatprep.subr.mxu0 0.0
  %308 = vmatpush1.msra.mxu0 %v110
  %309 = vmatprep.subr.mxu0 0.0
  %310 = vmatpush1.msra.mxu0 %v111
  %311 = vmatprep.subr.mxu0 0.0
  %312 = vmatpush1.msra.mxu0 %v112
  %313 = vmatprep.subr.mxu0 0.0
  %314 = vmatpush1.msra.mxu0 %v113
  %315 = vmatprep.subr.mxu0 0.0
  %316 = vmatpush1.msra.mxu0 %v114
  %317 = vmatprep.subr.mxu0 0.0
  %318 = vmatpush1.msra.mxu0 %v115
  %319 = vmatprep.subr.mxu0 0.0
  %320 = vmatpush1.msra.mxu0 %v116
  %321 = vmatprep.mubr.f32.mxu0 %v20
  %322 = vmatmul.mubr.f32.gmra.mrb[0].mxu0 %v19
  %v323 = vpop.f32.mrb[0].mxu0
  %v324 = vadd.f32 %v254, %v323
  %v325 = vpop.f32.mrb[0].mxu0
  %326 = vdwg.mxu0
  %v327 = vmul.f32 %v15, %v15
  %328 = vadd.xlane.f32.xlu0 %v327
  %v329 = vpop.xlane.xlu0 %328
  %v330 = vadd.f32 %v329, 0.0
  %v331 = vmul.f32 %v16, %v16
  %332 = vadd.xlane.f32.xlu0 %v331
  %v333 = vpop.xlane.xlu0 %332
  %v334 = vadd.f32 %v330, %v333
  %v335 = vmul.f32 %v17, %v17
  %336 = vadd.xlane.f32.xlu0 %v335
  %v337 = vpop.xlane.xlu0 %336
  %v338 = vadd.f32 %v334, %v337
  %v339 = vmul.f32 %v18, %v18
  %340 = vadd.xlane.f32.xlu0 %v339
  %v341 = vpop.xlane.xlu0 %340
  %v342 = vadd.f32 %v338, %v341
  %v343 = vmul.f32 %v19, %v19
  %344 = vadd.xlane.f32.xlu0 %v343
  %v345 = vpop.xlane.xlu0 %344
  %v346 = vadd.f32 %v342, %v345
  %v347 = vmul.f32 %v20, %v20
  %348 = vadd.xlane.f32.xlu0 %v347
  %v349 = vpop.xlane.xlu0 %348
  %v350 = vadd.f32 %v346, %v349
  %s351 = sld [smem:[#allocation2]]
  %v352 = vstv %s351
  %v353 = vmul.f32 %v350, %v352
  %v354 = vmax.f32 %v353, 1e-16
  %v355 = vrsqrt.pop %v354
  %v356 = vmul.f32 %v324, %v355
  %v357 = vxor.u32 %v356, 2147483648
  %v358 = vmul.f32 %v357, 1.442695
  %v359 = vpow.pop %v358
  %v360 = vadd.f32 %v359, 1.0
  %v361 = vrcp.pop %v360
  %v362 = vmul.f32 1.0, %v361
  %v363 = vsub.f32 1.0, %v362
  %vm364 = vcmask 7168
  %365 = vst.msk [vmem:[%s3] sm:$0xff] %vm364, %v363
  %367 = vrot.lane.b32.xlu0 %v362, 1
  %v368 = vpop.permute.xlu0 %367
  %vm370 = vcmask 15368
  %371 = vst.msk [vmem:[%s3] sm:$0xff] %vm370, %v368
  // Predicated region
  $region14: #{tpu_custom_call.1} parent=0 // pred_check
    _
  $region15: #{tpu_custom_call.1} parent=0 // pred_check_branch
    %373 = sbr.rel (0) target = $region17
  $region16: #{tpu_custom_call.1} parent=0 // pred_region
    _
  $region17: #{tpu_custom_call.1} parent=0 // pred_fallthru
    _
  // Predicated region
  $region18: #{tpu_custom_call.1} parent=0 // pred_check
    _
  $region19: #{tpu_custom_call.1} parent=0 // pred_check_branch
    %375 = sbr.rel (0) target = $region21
  $region20: #{tpu_custom_call.1} parent=0 // pred_region
    _
  $region21: #{tpu_custom_call.1} parent=0 // pred_fallthru
    _

</llo_original>
